<compile_context>
chip_gen: v7x
topology: tpu7x:2x2x1
jax: 0.10.0
libtpu: 0.0.40
codegen_flags: <defaults>
</compile_context>

<pallas_src>
import functools

import jax
import jax.numpy as jnp
import numpy as np
from jax.experimental import pallas as pl
from jax.experimental.pallas import tpu as pltpu


def nima_kernel(x_ref, w1_ref, b1_ref, w2_ref, b2_ref, o_ref, acc_ref, *, hw_total):
    """One (batch-tile, spatial-tile) grid step of the fused NIMA forward.

    x_ref  : (TN, C, THW)  activations; NCHW with spatial flattened (no transpose),
                           HW on the lane dim (lane-dense).
    w1_ref : (C, F)        1x1-conv weight of the synthetic backbone
    b1_ref : (1, F)        1x1-conv bias
    w2_ref : (F, 10)       head Linear weight (in_features x out_features)
    b2_ref : (1, 10)       head Linear bias
    o_ref  : (TN, 10)      softmax scores
    acc_ref: (TN, F) f32   VMEM accumulator of the spatial sum (AdaptiveAvgPool2d(1))
    """
    j = pl.program_id(1)

    @pl.when(j == 0)
    def _():
        acc_ref[...] = jnp.zeros_like(acc_ref)

    x = x_ref[...]                      # (TN, C, THW)
    w1 = w1_ref[...]                    # (C, F)
    b1 = b1_ref[...]                    # (1, F)

    # --- base_model: 1x1 conv (channel contraction) + ReLU --------------------
    # C is tiny (4): unrolled broadcast-FMA on the VPU instead of pushing a
    # nearly-empty K=4 pass through the MXU.  (For large C, tile K in 128/256
    # multiples and use jnp.dot with preferred_element_type=f32 instead.)
    C = x.shape[1]
    feat = None
    for c in range(C):
        term = w1[c:c + 1, :][:, :, None] * x[:, c, :][:, None, :]   # (TN, F, THW)
        feat = term if feat is None else feat + term
    feat = jnp.maximum(feat + b1[:, :, None], 0.0)                   # conv bias + ReLU

    # --- AdaptiveAvgPool2d(1): accumulate spatial sum across spatial tiles ----
    acc_ref[...] += jnp.sum(feat, axis=2).astype(acc_ref.dtype)      # (TN, F)

    @pl.when(j == pl.num_programs(1) - 1)
    def _():
        pooled = acc_ref[...] * (1.0 / hw_total)                     # mean -> x.view(N, -1)
        # head: the leading ReLU is redundant here (mean of ReLU outputs >= 0);
        # nn.Dropout(p) is the identity at inference time.
        # TODO(synk): training-mode dropout would need pltpu.prng_seed + stateful_bernoulli.
        logits = jnp.dot(pooled, w2_ref[...],
                         preferred_element_type=jnp.float32) + b2_ref[...]
        # numerically-stable softmax over dim=1
        logits = logits - jnp.max(logits, axis=1, keepdims=True)
        e = jnp.exp(logits)
        inv = pl.reciprocal(jnp.sum(e, axis=1, keepdims=True), approx=True)  # EUP slot
        # NOTE: output last dim is 10 (<128) -> masked store; written once per batch
        # tile, negligible.
        o_ref[...] = (e * inv).astype(o_ref.dtype)


def _pick_batch_tile(n, cap=8):
    """Largest divisor of n that is <= cap."""
    for t in range(min(cap, n), 0, -1):
        if n % t == 0:
            return t
    return n


def _pick_spatial_tile(hw, cap=2048, align=128):
    """Largest 128-aligned divisor of hw, capped; falls back to full hw."""
    if hw % align != 0:
        return hw
    t = min((cap // align) * align, (hw // align) * align)
    while t >= align:
        if hw % t == 0:
            return t
        t -= align
    return hw


@jax.jit
def nima_forward(x_nchw, w1, b1, w2, b2):
    """x_nchw: (N, C, H, W), PyTorch layout. Returns (N, 10) softmax scores."""
    N, C, H, W = x_nchw.shape
    F = w1.shape[1]
    HW = H * W

    # NCHW -> (N, C, HW) is a *free* reshape: no transpose, no extra HBM round-trip.
    x = x_nchw.reshape(N, C, HW)
    b1_2d = b1.reshape(1, F)
    b2_2d = b2.reshape(1, 10)

    # Tile sizes: batch tile TN (divides N), spatial tile THW (128-aligned divisor
    # of HW, large enough to amortize per-grid-step overhead, small enough that the
    # per-step (TN, F, THW) f32 intermediate stays a couple of MiB).
    TN = _pick_batch_tile(N)
    THW = _pick_spatial_tile(HW)

    kernel = functools.partial(nima_kernel, hw_total=float(HW))

    return pl.pallas_call(
        kernel,
        out_shape=jax.ShapeDtypeStruct((N, 10), jnp.float32),
        grid=(N // TN, HW // THW),            # (batch tiles, spatial/reduction tiles)
        in_specs=[
            pl.BlockSpec((TN, C, THW), lambda i, j: (i, 0, j)),
            pl.BlockSpec((C, F), lambda i, j: (0, 0)),
            pl.BlockSpec((1, F), lambda i, j: (0, 0)),
            pl.BlockSpec((F, 10), lambda i, j: (0, 0)),
            pl.BlockSpec((1, 10), lambda i, j: (0, 0)),
        ],
        out_specs=pl.BlockSpec((TN, 10), lambda i, j: (i, 0)),
        scratch_shapes=[pltpu.VMEM((TN, F), jnp.float32)],
        compiler_params=pltpu.CompilerParams(
            # batch axis parallel (2 TCs on v7x), spatial reduction last + arbitrary
            dimension_semantics=("parallel", "arbitrary"),
            # explicit, safe on v7x's 64 MiB VMEM (and v5e/v6e) with double-buffering
            vmem_limit_bytes=32 * 1024 * 1024,
        ),
    )(x, w1, b1_2d, w2, b2_2d)


def nima_reference(x_nchw, w1, b1, w2, b2):
    """Pure-JAX reference matching the PyTorch semantics (eval mode)."""
    N, C, H, W = x_nchw.shape
    x = jnp.transpose(x_nchw, (0, 2, 3, 1)).reshape(N, H * W, C)
    feat = jnp.maximum(jnp.einsum("nsc,cf->nsf", x, w1) + b1[None, None, :], 0.0)
    pooled = jnp.mean(feat, axis=1)                      # (N, F) == x.view(N, -1)
    h = jnp.maximum(pooled, 0.0)                         # head ReLU (dropout=id in eval)
    logits = h @ w2 + b2[None, :]
    return jax.nn.softmax(logits, axis=1)


if __name__ == "__main__":
    # Small shapes consistent with the forward: batch=2, channels=4, spatial=16x16,
    # backbone output features (input_features of the head) = 32.
    N, C, H, W = 2, 4, 16, 16
    F = 32  # input_features

    key = jax.random.PRNGKey(0)
    kx, kw1, kb1, kw2, kb2 = jax.random.split(key, 5)

    x = jax.random.normal(kx, (N, C, H, W), dtype=jnp.float32)
    # Deterministic synthetic parameters (no checkpoint load).
    w1 = jax.random.normal(kw1, (C, F), dtype=jnp.float32) * 0.1
    b1 = jax.random.normal(kb1, (F,), dtype=jnp.float32) * 0.1
    w2 = jax.random.normal(kw2, (F, 10), dtype=jnp.float32) * 0.1
    b2 = jax.random.normal(kb2, (10,), dtype=jnp.float32) * 0.1

    out = jax.block_until_ready(nima_forward(x, w1, b1, w2, b2))
    ref = jax.block_until_ready(nima_reference(x, w1, b1, w2, b2))

    # pl.reciprocal(approx=True) in the softmax denominator perturbs results by
    # at most ~1e-4 relative, so compare at 1e-3.
    np.testing.assert_allclose(np.asarray(out), np.asarray(ref), rtol=1e-3, atol=1e-3)
    # Softmax rows should sum to ~1 (up to the approx-reciprocal error).
    np.testing.assert_allclose(np.asarray(out).sum(axis=1), np.ones(N), rtol=2e-3, atol=2e-3)

    print("KERNEL_OK")
</pallas_src>

<mosaic_0001>
module attributes {stable_mosaic.version = 11 : i64} {
  func.func @nima_kernel(%arg0: i32, %arg1: i32, %arg2: memref<2x4x256xf32, #tpu.memory_space<vmem>>, %arg3: memref<4x32xf32, #tpu.memory_space<vmem>>, %arg4: memref<1x32xf32, #tpu.memory_space<vmem>>, %arg5: memref<32x10xf32, #tpu.memory_space<vmem>>, %arg6: memref<1x10xf32, #tpu.memory_space<vmem>>, %arg7: memref<2x10xf32, #tpu.memory_space<vmem>>, %arg8: memref<2x32xf32, #tpu.memory_space<vmem>>) attributes {dimension_semantics = [#tpu.dimension_semantics<parallel>, #tpu.dimension_semantics<arbitrary>], iteration_bounds = array<i64: 1, 1>, scalar_prefetch = 0 : i64, scratch_operands = 1 : i64, tpu.core_type = #tpu.core_type<tc>, window_params = [{transform_indices = @transform_0, window_bounds = array<i64: 2, 4, 256>}, {pipeline_mode = #tpu.pipeline_mode<synchronous>, transform_indices = @transform_1, window_bounds = array<i64: 4, 32>}, {pipeline_mode = #tpu.pipeline_mode<synchronous>, transform_indices = @transform_2, window_bounds = array<i64: 1, 32>}, {pipeline_mode = #tpu.pipeline_mode<synchronous>, transform_indices = @transform_3, window_bounds = array<i64: 32, 10>}, {pipeline_mode = #tpu.pipeline_mode<synchronous>, transform_indices = @transform_4, window_bounds = array<i64: 1, 10>}, {transform_indices = @transform_5, window_bounds = array<i64: 2, 10>}]} {
    %c0_i32 = arith.constant 0 : i32
    %0 = arith.cmpi eq, %arg1, %c0_i32 : i32
    %1 = arith.extui %0 : i1 to i32
    %c0_i32_0 = arith.constant 0 : i32
    %2 = arith.cmpi ne, %1, %c0_i32_0 : i32
    scf.if %2 {
      %cst_14 = arith.constant 0.000000e+00 : f32
      %53 = vector.broadcast %cst_14 : f32 to vector<2x32xf32>
      %c0_15 = arith.constant 0 : index
      %c0_16 = arith.constant 0 : index
      %54 = vector.load %arg8[%c0_15, %c0_16] : memref<2x32xf32, #tpu.memory_space<vmem>>, vector<2x32xf32>
      tpu.vector_store %arg8[%c0_15, %c0_16], %53 {strides = array<i32>} : memref<2x32xf32, #tpu.memory_space<vmem>>, vector<2x32xf32>,
    } else {
    }
    %c0 = arith.constant 0 : index
    %c0_1 = arith.constant 0 : index
    %c0_2 = arith.constant 0 : index
    %3 = vector.load %arg2[%c0, %c0_1, %c0_2] : memref<2x4x256xf32, #tpu.memory_space<vmem>>, vector<2x4x256xf32>
    %c0_3 = arith.constant 0 : index
    %c0_4 = arith.constant 0 : index
    %4 = vector.load %arg3[%c0_3, %c0_4] : memref<4x32xf32, #tpu.memory_space<vmem>>, vector<4x32xf32>
    %c0_5 = arith.constant 0 : index
    %c0_6 = arith.constant 0 : index
    %5 = vector.load %arg4[%c0_5, %c0_6] : memref<1x32xf32, #tpu.memory_space<vmem>>, vector<1x32xf32>
    %6 = vector.extract_strided_slice %4 {offsets = [0, 0], sizes = [1, 32], strides = [1, 1]} : vector<4x32xf32> to vector<1x32xf32>
    %7 = vector.shape_cast %6 : vector<1x32xf32> to vector<1x32x1xf32>
    %8 = vector.extract_strided_slice %3 {offsets = [0, 0, 0], sizes = [2, 1, 256], strides = [1, 1, 1]} : vector<2x4x256xf32> to vector<2x1x256xf32>
    %9 = vector.shape_cast %8 : vector<2x1x256xf32> to vector<2x256xf32>
    %10 = vector.shape_cast %9 : vector<2x256xf32> to vector<2x1x256xf32>
    %11 = vector.broadcast %7 : vector<1x32x1xf32> to vector<2x32x256xf32>
    %12 = vector.broadcast %10 : vector<2x1x256xf32> to vector<2x32x256xf32>
    %13 = arith.mulf %11, %12 : vector<2x32x256xf32>
    %14 = vector.extract_strided_slice %4 {offsets = [1, 0], sizes = [1, 32], strides = [1, 1]} : vector<4x32xf32> to vector<1x32xf32>
    %15 = vector.shape_cast %14 : vector<1x32xf32> to vector<1x32x1xf32>
    %16 = vector.extract_strided_slice %3 {offsets = [0, 1, 0], sizes = [2, 1, 256], strides = [1, 1, 1]} : vector<2x4x256xf32> to vector<2x1x256xf32>
    %17 = vector.shape_cast %16 : vector<2x1x256xf32> to vector<2x256xf32>
    %18 = vector.shape_cast %17 : vector<2x256xf32> to vector<2x1x256xf32>
    %19 = vector.broadcast %15 : vector<1x32x1xf32> to vector<2x32x256xf32>
    %20 = vector.broadcast %18 : vector<2x1x256xf32> to vector<2x32x256xf32>
    %21 = arith.mulf %19, %20 : vector<2x32x256xf32>
    %22 = arith.addf %13, %21 : vector<2x32x256xf32>
    %23 = vector.extract_strided_slice %4 {offsets = [2, 0], sizes = [1, 32], strides = [1, 1]} : vector<4x32xf32> to vector<1x32xf32>
    %24 = vector.shape_cast %23 : vector<1x32xf32> to vector<1x32x1xf32>
    %25 = vector.extract_strided_slice %3 {offsets = [0, 2, 0], sizes = [2, 1, 256], strides = [1, 1, 1]} : vector<2x4x256xf32> to vector<2x1x256xf32>
    %26 = vector.shape_cast %25 : vector<2x1x256xf32> to vector<2x256xf32>
    %27 = vector.shape_cast %26 : vector<2x256xf32> to vector<2x1x256xf32>
    %28 = vector.broadcast %24 : vector<1x32x1xf32> to vector<2x32x256xf32>
    %29 = vector.broadcast %27 : vector<2x1x256xf32> to vector<2x32x256xf32>
    %30 = arith.mulf %28, %29 : vector<2x32x256xf32>
    %31 = arith.addf %22, %30 : vector<2x32x256xf32>
    %32 = vector.extract_strided_slice %4 {offsets = [3, 0], sizes = [1, 32], strides = [1, 1]} : vector<4x32xf32> to vector<1x32xf32>
    %33 = vector.shape_cast %32 : vector<1x32xf32> to vector<1x32x1xf32>
    %34 = vector.extract_strided_slice %3 {offsets = [0, 3, 0], sizes = [2, 1, 256], strides = [1, 1, 1]} : vector<2x4x256xf32> to vector<2x1x256xf32>
    %35 = vector.shape_cast %34 : vector<2x1x256xf32> to vector<2x256xf32>
    %36 = vector.shape_cast %35 : vector<2x256xf32> to vector<2x1x256xf32>
    %37 = vector.broadcast %33 : vector<1x32x1xf32> to vector<2x32x256xf32>
    %38 = vector.broadcast %36 : vector<2x1x256xf32> to vector<2x32x256xf32>
    %39 = arith.mulf %37, %38 : vector<2x32x256xf32>
    %40 = arith.addf %31, %39 : vector<2x32x256xf32>
    %41 = vector.shape_cast %5 : vector<1x32xf32> to vector<1x32x1xf32>
    %42 = vector.broadcast %41 : vector<1x32x1xf32> to vector<2x32x256xf32>
    %43 = arith.addf %40, %42 : vector<2x32x256xf32>
    %cst = arith.constant 0.000000e+00 : f32
    %44 = vector.broadcast %cst : f32 to vector<2x32x256xf32>
    %45 = arith.maximumf %43, %44 : vector<2x32x256xf32>
    %c0_7 = arith.constant 0 : index
    %c0_8 = arith.constant 0 : index
    %46 = vector.load %arg8[%c0_7, %c0_8] : memref<2x32xf32, #tpu.memory_space<vmem>>, vector<2x32xf32>
    %cst_9 = arith.constant dense<0.000000e+00> : vector<2x32xf32>
    %47 = vector.multi_reduction <add>, %45, %cst_9 [2] : vector<2x32x256xf32> to vector<2x32xf32>
    %48 = arith.addf %46, %47 : vector<2x32xf32>
    %c0_10 = arith.constant 0 : index
    %c0_11 = arith.constant 0 : index
    %49 = vector.load %arg8[%c0_10, %c0_11] : memref<2x32xf32, #tpu.memory_space<vmem>>, vector<2x32xf32>
    tpu.vector_store %arg8[%c0_10, %c0_11], %48 {strides = array<i32>} : memref<2x32xf32, #tpu.memory_space<vmem>>, vector<2x32xf32>,
    %c0_i32_12 = arith.constant 0 : i32
    %50 = arith.cmpi eq, %arg1, %c0_i32_12 : i32
    %51 = arith.extui %50 : i1 to i32
    %c0_i32_13 = arith.constant 0 : i32
    %52 = arith.cmpi ne, %51, %c0_i32_13 : i32
    scf.if %52 {
      %c0_14 = arith.constant 0 : index
      %c0_15 = arith.constant 0 : index
      %53 = vector.load %arg8[%c0_14, %c0_15] : memref<2x32xf32, #tpu.memory_space<vmem>>, vector<2x32xf32>
      %cst_16 = arith.constant 3.906250e-03 : f32
      %54 = vector.broadcast %cst_16 : f32 to vector<2x32xf32>
      %55 = arith.mulf %53, %54 : vector<2x32xf32>
      %c0_17 = arith.constant 0 : index
      %c0_18 = arith.constant 0 : index
      %56 = vector.load %arg5[%c0_17, %c0_18] : memref<32x10xf32, #tpu.memory_space<vmem>>, vector<32x10xf32>
      %cst_19 = arith.constant dense<0.000000e+00> : vector<2x10xf32>
      %57 = tpu.matmul %55, %56, %cst_19 {dimension_numbers = #tpu.dot_dimension_numbers<[1], [0], [0], [1], [0, 0, 1, 1], [], []>} : vector<2x32xf32>, vector<32x10xf32>, vector<2x10xf32> -> vector<2x10xf32>
      %c0_20 = arith.constant 0 : index
      %c0_21 = arith.constant 0 : index
      %58 = vector.load %arg6[%c0_20, %c0_21] : memref<1x10xf32, #tpu.memory_space<vmem>>, vector<1x10xf32>
      %59 = vector.broadcast %58 : vector<1x10xf32> to vector<2x10xf32>
      %60 = arith.addf %57, %59 : vector<2x10xf32>
      %cst_22 = arith.constant dense<0xFF800000> : vector<2xf32>
      %61 = vector.multi_reduction <maximumf>, %60, %cst_22 [1] : vector<2x10xf32> to vector<2xf32>
      %62 = vector.shape_cast %61 : vector<2xf32> to vector<2x1xf32>
      %63 = vector.broadcast %62 : vector<2x1xf32> to vector<2x10xf32>
      %64 = arith.subf %60, %63 : vector<2x10xf32>
      %65 = math.exp %64 : vector<2x10xf32>
      %cst_23 = arith.constant dense<0.000000e+00> : vector<2xf32>
      %66 = vector.multi_reduction <add>, %65, %cst_23 [1] : vector<2x10xf32> to vector<2xf32>
      %67 = vector.shape_cast %66 : vector<2xf32> to vector<2x1xf32>
      %68 = tpu.reciprocal %67 {approx = true} : vector<2x1xf32> -> vector<2x1xf32>
      %69 = vector.broadcast %68 : vector<2x1xf32> to vector<2x10xf32>
      %70 = arith.mulf %65, %69 : vector<2x10xf32>
      %c0_24 = arith.constant 0 : index
      %c0_25 = arith.constant 0 : index
      %71 = vector.load %arg7[%c0_24, %c0_25] : memref<2x10xf32, #tpu.memory_space<vmem>>, vector<2x10xf32>
      tpu.vector_store %arg7[%c0_24, %c0_25], %70 {strides = array<i32>} : memref<2x10xf32, #tpu.memory_space<vmem>>, vector<2x10xf32>,
    } else {
    }
    return
  }
  func.func @transform_0(%arg0: i32, %arg1: i32) -> (i32, i32, i32) {
    %c0_i32 = arith.constant 0 : i32
    %c0_i32_0 = arith.constant 0 : i32
    return %arg0, %c0_i32, %arg1 : i32, i32, i32
  }
  func.func @transform_1(%arg0: i32, %arg1: i32) -> (i32, i32) {
    %c0_i32 = arith.constant 0 : i32
    %c0_i32_0 = arith.constant 0 : i32
    %c0_i32_1 = arith.constant 0 : i32
    return %c0_i32, %c0_i32_0 : i32, i32
  }
  func.func @transform_2(%arg0: i32, %arg1: i32) -> (i32, i32) {
    %c0_i32 = arith.constant 0 : i32
    %c0_i32_0 = arith.constant 0 : i32
    %c0_i32_1 = arith.constant 0 : i32
    return %c0_i32, %c0_i32_0 : i32, i32
  }
  func.func @transform_3(%arg0: i32, %arg1: i32) -> (i32, i32) {
    %c0_i32 = arith.constant 0 : i32
    %c0_i32_0 = arith.constant 0 : i32
    %c0_i32_1 = arith.constant 0 : i32
    return %c0_i32, %c0_i32_0 : i32, i32
  }
  func.func @transform_4(%arg0: i32, %arg1: i32) -> (i32, i32) {
    %c0_i32 = arith.constant 0 : i32
    %c0_i32_0 = arith.constant 0 : i32
    %c0_i32_1 = arith.constant 0 : i32
    return %c0_i32, %c0_i32_0 : i32, i32
  }
  func.func @transform_5(%arg0: i32, %arg1: i32) -> (i32, i32) {
    %c0_i32 = arith.constant 0 : i32
    %c0_i32_0 = arith.constant 0 : i32
    return %arg0, %c0_i32 : i32, i32
  }
}

</mosaic_0001>

<llo_original>
// kernel: nima_forward.1
$region0: #{nima_forward.1}
  #allocation0 [shape = 'u32[]', space=smem, size = 0x4, offset = 0x4, fixed_abs, tag = 'smem constant byte address 0x4 - core index']
  #allocation1 [shape = 'u32[144,128]{1,0:T(1,128)}', space=vmem, size = 0x12000, scoped, tag = 'internal scratch']
  #allocation2 [shape = 'f32[2,32]{1,0:T(2,128)}', space=vmem, size = 0x400, scoped, tag = 'scratch operand']
  %s0 = inlined_call_operand.vmem [shape: f32[2,4,256], index: 0, kind: input, shape index: {}]
  %s1 = inlined_call_operand.vmem [shape: f32[4,32], index: 1, kind: input, shape index: {}]
  %s2 = inlined_call_operand.vmem [shape: f32[1,32], index: 2, kind: input, shape index: {}]
  %s3 = inlined_call_operand.vmem [shape: f32[32,10], index: 3, kind: input, shape index: {}]
  %s4 = inlined_call_operand.vmem [shape: f32[1,10], index: 4, kind: input, shape index: {}]
  %s5 = inlined_call_operand.hbm [shape: f32[2,10], index: 5, kind: output, shape index: {}]
  %s6 = sld [smem:[#allocation0]]
  $region38: #{nima_forward.1} parent=0
    _
  %s8 = ssub.s32 1, %s6
  %s9 = scalar_select 0, %s8, %s6
  $region1: #{nima_forward.1} parent=0
    #allocation3 [shape = 'u8[1024]{0}', space=vmem, size = 0x400, scoped, tag = 'output window, operand 0, single buffered']
    #allocation4 [shape = 's32[1]{0}', space=sflag, size = 0x4, scoped, tag = 'scoped memory for nima_forward.1']
    %10 = vsyncpa [#allocation4], 0
    // Predicated region
    $region2: #{nima_forward.1} parent=1 // pred_check
      _
    $region3: #{nima_forward.1} parent=1 // pred_check_branch
      %12 = sbr.rel (0) target = $region5
    $region4: #{nima_forward.1} parent=1 // pred_region
      _
    $region5: #{nima_forward.1} parent=1 // pred_fallthru
      _
    // Predicated region
    $region6: #{nima_forward.1} parent=1 // pred_check
      _
    $region7: #{nima_forward.1} parent=1 // pred_check_branch
      %14 = sbr.rel (0) target = $region9
    $region8: #{nima_forward.1} parent=1 // pred_region
      _
    $region9: #{nima_forward.1} parent=1 // pred_fallthru
      _
    // Predicated region
    $region10: #{nima_forward.1} parent=1 // pred_check
      _
    $region11: #{nima_forward.1} parent=1 // pred_check_branch
      %16 = sbr.rel (0) target = $region13
    $region12: #{nima_forward.1} parent=1 // pred_region
      _
    $region13: #{nima_forward.1} parent=1 // pred_fallthru
      _
    // Predicated region
    $region14: #{nima_forward.1} parent=1 // pred_check
      _
    $region15: #{nima_forward.1} parent=1 // pred_check_branch
      %18 = sbr.rel (0) target = $region17
    $region16: #{nima_forward.1} parent=1 // pred_region
      _
    $region17: #{nima_forward.1} parent=1 // pred_fallthru
      _
    // Predicated region
    $region18: #{nima_forward.1} parent=1 // pred_check
      _
    $region19: #{nima_forward.1} parent=1 // pred_check_branch
      %20 = sbr.rel (0) target = $region21
    $region20: #{nima_forward.1} parent=1 // pred_region
      _
    $region21: #{nima_forward.1} parent=1 // pred_fallthru
      _
    %p21 = scmp.eq.s32.totalorder 0, 0
    // Predicated region
    $region22: #{nima_forward.1} parent=1 // pred_check
      %p22 = pneg %p21
    $region23: #{nima_forward.1} parent=1 // pred_check_branch
      %24 = sbr.rel (%p22) target = $region25
    $region24: #{nima_forward.1} parent=1 // pred_region
      %vm25 = vcmask 254976
      %26 = vst.msk [vmem:[#allocation2] sm:$0x3] %vm25, 0.0
    $region25: #{nima_forward.1} parent=1 // pred_fallthru
      _
    %v27 = vld [vmem:[%s0] sm:$0xff]
    %v28 = vld [vmem:[%s0 + $0x8] sm:$0xff]
    %v29 = vld [vmem:[%s1] sm:$0xf]
    %v30 = vld [vmem:[%s2] sm:$0x1]
    %v31 = vlaneseq
    %v32 = vshrl.u32 %v31, 7
    %v33 = vsub.s32 0, %v32
    %v34 = vrot.slane %v29, %v33
    %36 = vbcast.lane.b32.xlu0 %v34, 256
    %v37 = vpop.permute.xlu0 %36
    %s39 = sor.u32 256, 8
    %40 = vbcast.lane.b32.xlu0 %v34, %s39
    %v41 = vpop.permute.xlu0 %40
    %s43 = sor.u32 256, 16
    %44 = vbcast.lane.b32.xlu0 %v34, %s43
    %v45 = vpop.permute.xlu0 %44
    %s47 = sor.u32 256, 24
    %48 = vbcast.lane.b32.xlu0 %v34, %s47
    %v49 = vpop.permute.xlu0 %48
    %v52 = vlaneseq
    %v53 = vshrl.u32 %v52, 7
    %v54 = vsub.s32 0, %v53
    %v55 = vrot.slane %v27, %v54
    %v56 = vlaneseq
    %v57 = vshrl.u32 %v56, 7
    %v58 = vsub.s32 4, %v57
    %v59 = vrot.slane %v27, %v58
    %v60 = vlaneseq
    %v61 = vshrl.u32 %v60, 7
    %v62 = vsub.s32 0, %v61
    %v63 = vrot.slane %v28, %v62
    %v64 = vlaneseq
    %v65 = vshrl.u32 %v64, 7
    %v66 = vsub.s32 4, %v65
    %v67 = vrot.slane %v28, %v66
    %v72 = vlaneseq
    %v73 = vshrl.u32 %v72, 7
    %v74 = vsub.s32 0, %v73
    %v75 = vrot.slane %v55, %v74
    %v76 = vlaneseq
    %v77 = vshrl.u32 %v76, 7
    %v78 = vsub.s32 0, %v77
    %v79 = vrot.slane %v59, %v78
    %v80 = vlaneseq
    %v81 = vshrl.u32 %v80, 7
    %v82 = vsub.s32 0, %v81
    %v83 = vrot.slane %v63, %v82
    %v84 = vlaneseq
    %v85 = vshrl.u32 %v84, 7
    %v86 = vsub.s32 0, %v85
    %v87 = vrot.slane %v67, %v86
    %v88 = vmul.f32 %v37, %v75
    %v89 = vmul.f32 %v37, %v79
    %v90 = vmul.f32 %v41, %v75
    %v91 = vmul.f32 %v41, %v79
    %v92 = vmul.f32 %v45, %v75
    %v93 = vmul.f32 %v45, %v79
    %v94 = vmul.f32 %v49, %v75
    %v95 = vmul.f32 %v49, %v79
    %v96 = vmul.f32 %v37, %v83
    %v97 = vmul.f32 %v37, %v87
    %v98 = vmul.f32 %v41, %v83
    %v99 = vmul.f32 %v41, %v87
    %v100 = vmul.f32 %v45, %v83
    %v101 = vmul.f32 %v45, %v87
    %v102 = vmul.f32 %v49, %v83
    %v103 = vmul.f32 %v49, %v87
    %v104 = vlaneseq
    %v105 = vshrl.u32 %v104, 7
    %v106 = vsub.s32 1, %v105
    %v107 = vrot.slane %v29, %v106
    %109 = vbcast.lane.b32.xlu0 %v107, 256
    %v110 = vpop.permute.xlu0 %109
    %s112 = sor.u32 256, 8
    %113 = vbcast.lane.b32.xlu0 %v107, %s112
    %v114 = vpop.permute.xlu0 %113
    %s116 = sor.u32 256, 16
    %117 = vbcast.lane.b32.xlu0 %v107, %s116
    %v118 = vpop.permute.xlu0 %117
    %s120 = sor.u32 256, 24
    %121 = vbcast.lane.b32.xlu0 %v107, %s120
    %v122 = vpop.permute.xlu0 %121
    %v123 = vlaneseq
    %v124 = vshrl.u32 %v123, 7
    %v125 = vsub.s32 1, %v124
    %v126 = vrot.slane %v27, %v125
    %v127 = vlaneseq
    %v128 = vshrl.u32 %v127, 7
    %v129 = vsub.s32 5, %v128
    %v130 = vrot.slane %v27, %v129
    %v131 = vlaneseq
    %v132 = vshrl.u32 %v131, 7
    %v133 = vsub.s32 1, %v132
    %v134 = vrot.slane %v28, %v133
    %v135 = vlaneseq
    %v136 = vshrl.u32 %v135, 7
    %v137 = vsub.s32 5, %v136
    %v138 = vrot.slane %v28, %v137
    %v143 = vlaneseq
    %v144 = vshrl.u32 %v143, 7
    %v145 = vsub.s32 1, %v144
    %v146 = vrot.slane %v126, %v145
    %v147 = vlaneseq
    %v148 = vshrl.u32 %v147, 7
    %v149 = vsub.s32 1, %v148
    %v150 = vrot.slane %v130, %v149
    %v151 = vlaneseq
    %v152 = vshrl.u32 %v151, 7
    %v153 = vsub.s32 1, %v152
    %v154 = vrot.slane %v134, %v153
    %v155 = vlaneseq
    %v156 = vshrl.u32 %v155, 7
    %v157 = vsub.s32 1, %v156
    %v158 = vrot.slane %v138, %v157
    %v159 = vmul.f32 %v110, %v146
    %v160 = vmul.f32 %v110, %v150
    %v161 = vmul.f32 %v114, %v146
    %v162 = vmul.f32 %v114, %v150
    %v163 = vmul.f32 %v118, %v146
    %v164 = vmul.f32 %v118, %v150
    %v165 = vmul.f32 %v122, %v146
    %v166 = vmul.f32 %v122, %v150
    %v167 = vmul.f32 %v110, %v154
    %v168 = vmul.f32 %v110, %v158
    %v169 = vmul.f32 %v114, %v154
    %v170 = vmul.f32 %v114, %v158
    %v171 = vmul.f32 %v118, %v154
    %v172 = vmul.f32 %v118, %v158
    %v173 = vmul.f32 %v122, %v154
    %v174 = vmul.f32 %v122, %v158
    %v175 = vadd.f32 %v88, %v159
    %v176 = vadd.f32 %v89, %v160
    %v177 = vadd.f32 %v90, %v161
    %v178 = vadd.f32 %v91, %v162
    %v179 = vadd.f32 %v92, %v163
    %v180 = vadd.f32 %v93, %v164
    %v181 = vadd.f32 %v94, %v165
    %v182 = vadd.f32 %v95, %v166
    %v183 = vadd.f32 %v96, %v167
    %v184 = vadd.f32 %v97, %v168
    %v185 = vadd.f32 %v98, %v169
    %v186 = vadd.f32 %v99, %v170
    %v187 = vadd.f32 %v100, %v171
    %v188 = vadd.f32 %v101, %v172
    %v189 = vadd.f32 %v102, %v173
    %v190 = vadd.f32 %v103, %v174
    %v191 = vlaneseq
    %v192 = vshrl.u32 %v191, 7
    %v193 = vsub.s32 2, %v192
    %v194 = vrot.slane %v29, %v193
    %196 = vbcast.lane.b32.xlu0 %v194, 256
    %v197 = vpop.permute.xlu0 %196
    %s199 = sor.u32 256, 8
    %200 = vbcast.lane.b32.xlu0 %v194, %s199
    %v201 = vpop.permute.xlu0 %200
    %s203 = sor.u32 256, 16
    %204 = vbcast.lane.b32.xlu0 %v194, %s203
    %v205 = vpop.permute.xlu0 %204
    %s207 = sor.u32 256, 24
    %208 = vbcast.lane.b32.xlu0 %v194, %s207
    %v209 = vpop.permute.xlu0 %208
    %v210 = vlaneseq
    %v211 = vshrl.u32 %v210, 7
    %v212 = vsub.s32 2, %v211
    %v213 = vrot.slane %v27, %v212
    %v214 = vlaneseq
    %v215 = vshrl.u32 %v214, 7
    %v216 = vsub.s32 6, %v215
    %v217 = vrot.slane %v27, %v216
    %v218 = vlaneseq
    %v219 = vshrl.u32 %v218, 7
    %v220 = vsub.s32 2, %v219
    %v221 = vrot.slane %v28, %v220
    %v222 = vlaneseq
    %v223 = vshrl.u32 %v222, 7
    %v224 = vsub.s32 6, %v223
    %v225 = vrot.slane %v28, %v224
    %v230 = vlaneseq
    %v231 = vshrl.u32 %v230, 7
    %v232 = vsub.s32 2, %v231
    %v233 = vrot.slane %v213, %v232
    %v234 = vlaneseq
    %v235 = vshrl.u32 %v234, 7
    %v236 = vsub.s32 2, %v235
    %v237 = vrot.slane %v217, %v236
    %v238 = vlaneseq
    %v239 = vshrl.u32 %v238, 7
    %v240 = vsub.s32 2, %v239
    %v241 = vrot.slane %v221, %v240
    %v242 = vlaneseq
    %v243 = vshrl.u32 %v242, 7
    %v244 = vsub.s32 2, %v243
    %v245 = vrot.slane %v225, %v244
    %v246 = vmul.f32 %v197, %v233
    %v247 = vmul.f32 %v197, %v237
    %v248 = vmul.f32 %v201, %v233
    %v249 = vmul.f32 %v201, %v237
    %v250 = vmul.f32 %v205, %v233
    %v251 = vmul.f32 %v205, %v237
    %v252 = vmul.f32 %v209, %v233
    %v253 = vmul.f32 %v209, %v237
    %v254 = vmul.f32 %v197, %v241
    %v255 = vmul.f32 %v197, %v245
    %v256 = vmul.f32 %v201, %v241
    %v257 = vmul.f32 %v201, %v245
    %v258 = vmul.f32 %v205, %v241
    %v259 = vmul.f32 %v205, %v245
    %v260 = vmul.f32 %v209, %v241
    %v261 = vmul.f32 %v209, %v245
    %v262 = vadd.f32 %v175, %v246
    %v263 = vadd.f32 %v176, %v247
    %v264 = vadd.f32 %v177, %v248
    %v265 = vadd.f32 %v178, %v249
    %v266 = vadd.f32 %v179, %v250
    %v267 = vadd.f32 %v180, %v251
    %v268 = vadd.f32 %v181, %v252
    %v269 = vadd.f32 %v182, %v253
    %v270 = vadd.f32 %v183, %v254
    %v271 = vadd.f32 %v184, %v255
    %v272 = vadd.f32 %v185, %v256
    %v273 = vadd.f32 %v186, %v257
    %v274 = vadd.f32 %v187, %v258
    %v275 = vadd.f32 %v188, %v259
    %v276 = vadd.f32 %v189, %v260
    %v277 = vadd.f32 %v190, %v261
    %v278 = vlaneseq
    %v279 = vshrl.u32 %v278, 7
    %v280 = vsub.s32 3, %v279
    %v281 = vrot.slane %v29, %v280
    %283 = vbcast.lane.b32.xlu0 %v281, 256
    %v284 = vpop.permute.xlu0 %283
    %s286 = sor.u32 256, 8
    %287 = vbcast.lane.b32.xlu0 %v281, %s286
    %v288 = vpop.permute.xlu0 %287
    %s290 = sor.u32 256, 16
    %291 = vbcast.lane.b32.xlu0 %v281, %s290
    %v292 = vpop.permute.xlu0 %291
    %s294 = sor.u32 256, 24
    %295 = vbcast.lane.b32.xlu0 %v281, %s294
    %v296 = vpop.permute.xlu0 %295
    %v297 = vlaneseq
    %v298 = vshrl.u32 %v297, 7
    %v299 = vsub.s32 3, %v298
    %v300 = vrot.slane %v27, %v299
    %v301 = vlaneseq
    %v302 = vshrl.u32 %v301, 7
    %v303 = vsub.s32 7, %v302
    %v304 = vrot.slane %v27, %v303
    %v305 = vlaneseq
    %v306 = vshrl.u32 %v305, 7
    %v307 = vsub.s32 3, %v306
    %v308 = vrot.slane %v28, %v307
    %v309 = vlaneseq
    %v310 = vshrl.u32 %v309, 7
    %v311 = vsub.s32 7, %v310
    %v312 = vrot.slane %v28, %v311
    %v317 = vlaneseq
    %v318 = vshrl.u32 %v317, 7
    %v319 = vsub.s32 3, %v318
    %v320 = vrot.slane %v300, %v319
    %v321 = vlaneseq
    %v322 = vshrl.u32 %v321, 7
    %v323 = vsub.s32 3, %v322
    %v324 = vrot.slane %v304, %v323
    %v325 = vlaneseq
    %v326 = vshrl.u32 %v325, 7
    %v327 = vsub.s32 3, %v326
    %v328 = vrot.slane %v308, %v327
    %v329 = vlaneseq
    %v330 = vshrl.u32 %v329, 7
    %v331 = vsub.s32 3, %v330
    %v332 = vrot.slane %v312, %v331
    %v333 = vmul.f32 %v284, %v320
    %v334 = vmul.f32 %v284, %v324
    %v335 = vmul.f32 %v288, %v320
    %v336 = vmul.f32 %v288, %v324
    %v337 = vmul.f32 %v292, %v320
    %v338 = vmul.f32 %v292, %v324
    %v339 = vmul.f32 %v296, %v320
    %v340 = vmul.f32 %v296, %v324
    %v341 = vmul.f32 %v284, %v328
    %v342 = vmul.f32 %v284, %v332
    %v343 = vmul.f32 %v288, %v328
    %v344 = vmul.f32 %v288, %v332
    %v345 = vmul.f32 %v292, %v328
    %v346 = vmul.f32 %v292, %v332
    %v347 = vmul.f32 %v296, %v328
    %v348 = vmul.f32 %v296, %v332
    %v349 = vadd.f32 %v262, %v333
    %v350 = vadd.f32 %v263, %v334
    %v351 = vadd.f32 %v264, %v335
    %v352 = vadd.f32 %v265, %v336
    %v353 = vadd.f32 %v266, %v337
    %v354 = vadd.f32 %v267, %v338
    %v355 = vadd.f32 %v268, %v339
    %v356 = vadd.f32 %v269, %v340
    %v357 = vadd.f32 %v270, %v341
    %v358 = vadd.f32 %v271, %v342
    %v359 = vadd.f32 %v272, %v343
    %v360 = vadd.f32 %v273, %v344
    %v361 = vadd.f32 %v274, %v345
    %v362 = vadd.f32 %v275, %v346
    %v363 = vadd.f32 %v276, %v347
    %v364 = vadd.f32 %v277, %v348
    %v365 = vlaneseq
    %v366 = vshrl.u32 %v365, 7
    %v367 = vsub.s32 0, %v366
    %v368 = vrot.slane %v30, %v367
    %370 = vbcast.lane.b32.xlu0 %v368, 256
    %v371 = vpop.permute.xlu0 %370
    %s373 = sor.u32 256, 8
    %374 = vbcast.lane.b32.xlu0 %v368, %s373
    %v375 = vpop.permute.xlu0 %374
    %s377 = sor.u32 256, 16
    %378 = vbcast.lane.b32.xlu0 %v368, %s377
    %v379 = vpop.permute.xlu0 %378
    %s381 = sor.u32 256, 24
    %382 = vbcast.lane.b32.xlu0 %v368, %s381
    %v383 = vpop.permute.xlu0 %382
    %v384 = vadd.f32 %v349, %v371
    %v385 = vadd.f32 %v350, %v371
    %v386 = vadd.f32 %v351, %v375
    %v387 = vadd.f32 %v352, %v375
    %v388 = vadd.f32 %v353, %v379
    %v389 = vadd.f32 %v354, %v379
    %v390 = vadd.f32 %v355, %v383
    %v391 = vadd.f32 %v356, %v383
    %v392 = vadd.f32 %v357, %v371
    %v393 = vadd.f32 %v358, %v371
    %v394 = vadd.f32 %v359, %v375
    %v395 = vadd.f32 %v360, %v375
    %v396 = vadd.f32 %v361, %v379
    %v397 = vadd.f32 %v362, %v379
    %v398 = vadd.f32 %v363, %v383
    %v399 = vadd.f32 %v364, %v383
    %v400 = vmax.f32 %v384, 0.0
    %v401 = vmax.f32 %v385, 0.0
    %v402 = vmax.f32 %v386, 0.0
    %v403 = vmax.f32 %v387, 0.0
    %v404 = vmax.f32 %v388, 0.0
    %v405 = vmax.f32 %v389, 0.0
    %v406 = vmax.f32 %v390, 0.0
    %v407 = vmax.f32 %v391, 0.0
    %v408 = vmax.f32 %v392, 0.0
    %v409 = vmax.f32 %v393, 0.0
    %v410 = vmax.f32 %v394, 0.0
    %v411 = vmax.f32 %v395, 0.0
    %v412 = vmax.f32 %v396, 0.0
    %v413 = vmax.f32 %v397, 0.0
    %v414 = vmax.f32 %v398, 0.0
    %v415 = vmax.f32 %v399, 0.0
    %v416 = vld [vmem:[#allocation2] sm:$0x3]
    %v417 = vadd.f32 %v400, %v401
    %418 = vadd.xlane.f32.xlu0 %v417
    %v419 = vpop.xlane.xlu0 %418
    %v420 = vadd.f32 %v402, %v403
    %421 = vadd.xlane.f32.xlu0 %v420
    %v422 = vpop.xlane.xlu0 %421
    %v423 = vadd.f32 %v404, %v405
    %424 = vadd.xlane.f32.xlu0 %v423
    %v425 = vpop.xlane.xlu0 %424
    %v426 = vadd.f32 %v406, %v407
    %427 = vadd.xlane.f32.xlu0 %v426
    %v428 = vpop.xlane.xlu0 %427
    %v429 = vadd.f32 %v408, %v409
    %430 = vadd.xlane.f32.xlu0 %v429
    %v431 = vpop.xlane.xlu0 %430
    %v432 = vadd.f32 %v410, %v411
    %433 = vadd.xlane.f32.xlu0 %v432
    %v434 = vpop.xlane.xlu0 %433
    %v435 = vadd.f32 %v412, %v413
    %436 = vadd.xlane.f32.xlu0 %v435
    %v437 = vpop.xlane.xlu0 %436
    %v438 = vadd.f32 %v414, %v415
    %439 = vadd.xlane.f32.xlu0 %v438
    %v440 = vpop.xlane.xlu0 %439
    %v449 = vlaneseq
    %v450 = vand.u32 %v449, 127
    %v451 = vlaneseq
    %v452 = vshrl.u32 %v451, 7
    %v453 = vsub.s32 %v450, %v452
    %v454 = vrot.slane %v419, %v453
    %v455 = vadd.s32 %v450, 4294967288
    %v456 = vlaneseq
    %v457 = vshrl.u32 %v456, 7
    %v458 = vsub.s32 %v455, %v457
    %v459 = vrot.slane %v422, %v458
    %vm460 = vcmask 130112
    %v461 = vsel %vm460, %v459, %v454
    %v462 = vadd.s32 %v450, 4294967280
    %v463 = vlaneseq
    %v464 = vshrl.u32 %v463, 7
    %v465 = vsub.s32 %v462, %v464
    %v466 = vrot.slane %v425, %v465
    %vm467 = vcmask 195712
    %v468 = vsel %vm467, %v466, %v461
    %v469 = vadd.s32 %v450, 4294967272
    %v470 = vlaneseq
    %v471 = vshrl.u32 %v470, 7
    %v472 = vsub.s32 %v469, %v471
    %v473 = vrot.slane %v428, %v472
    %vm474 = vcmask 261312
    %v475 = vsel %vm474, %v473, %v468
    %v476 = vlaneseq
    %v477 = vshrl.u32 %v476, 7
    %v478 = vsub.s32 %v450, %v477
    %v479 = vrot.slane %v431, %v478
    %v480 = vlaneseq
    %v481 = vshrl.u32 %v480, 7
    %v482 = vsub.s32 %v455, %v481
    %v483 = vrot.slane %v434, %v482
    %v484 = vsel %vm460, %v483, %v479
    %v485 = vlaneseq
    %v486 = vshrl.u32 %v485, 7
    %v487 = vsub.s32 %v462, %v486
    %v488 = vrot.slane %v437, %v487
    %v489 = vsel %vm467, %v488, %v484
    %v490 = vlaneseq
    %v491 = vshrl.u32 %v490, 7
    %v492 = vsub.s32 %v469, %v491
    %v493 = vrot.slane %v440, %v492
    %v494 = vsel %vm474, %v493, %v489
    %vm495 = vcmask 1041409
    %v496 = vsel %vm495, %v494, %v475
    %v498 = vadd.f32 %v416, %v496
    %vm499 = vcmask 254976
    %500 = vst.msk [vmem:[#allocation2] sm:$0x3] %vm499, %v498
    // Predicated region
    $region26: #{nima_forward.1} parent=1 // pred_check
      %p501 = pneg %p21
    $region27: #{nima_forward.1} parent=1 // pred_check_branch
      %503 = sbr.rel (%p501) target = $region29
    $region28: #{nima_forward.1} parent=1 // pred_region
      %v504 = vld [vmem:[#allocation2] sm:$0x3]
      %v505 = vmul.f32 %v504, 0.00390625
      %v506 = vld [vmem:[%s3] sm:$0xff]
      %v507 = vld [vmem:[%s3 + $0x8] sm:$0xff]
      %v508 = vld [vmem:[%s3 + $0x10] sm:$0xff]
      %v509 = vld [vmem:[%s3 + $0x18] sm:$0xff]
      %v510 = vld [vmem:[%s4] sm:$0x1]
      %v512 = vlaneseq
      %v513 = vshrl.u32 %v512, 7
      %v514 = vsub.s32 0, %v513
      %v515 = vrot.slane %v510, %v514
      %vm517 = vcmask 261120
      %v519 = vsel %vm517, %v505, 0
      %521 = vmatprep.subr.mxu0 0.0
      %522 = vmatpush1.msra.mxu0 %v506
      %523 = vmatprep.subr.mxu0 0.0
      %524 = vmatpush1.msra.mxu0 %v507
      %525 = vmatprep.subr.mxu0 0.0
      %526 = vmatpush1.msra.mxu0 %v508
      %527 = vmatprep.subr.mxu0 0.0
      %528 = vmatpush1.msra.mxu0 %v509
      %529 = vmatprep.subr.mxu0 0.0
      %530 = vmatpush1.msra.mxu0 0.0
      %531 = vmatprep.subr.mxu0 0.0
      %532 = vmatpush1.msra.mxu0 0.0
      %533 = vmatprep.subr.mxu0 0.0
      %534 = vmatpush1.msra.mxu0 0.0
      %535 = vmatprep.subr.mxu0 0.0
      %536 = vmatpush1.msra.mxu0 0.0
      %537 = vmatprep.subr.mxu0 0.0
      %538 = vmatpush1.msra.mxu0 0.0
      %539 = vmatprep.subr.mxu0 0.0
      %540 = vmatpush1.msra.mxu0 0.0
      %541 = vmatprep.subr.mxu0 0.0
      %542 = vmatpush1.msra.mxu0 0.0
      %543 = vmatprep.subr.mxu0 0.0
      %544 = vmatpush1.msra.mxu0 0.0
      %545 = vmatprep.subr.mxu0 0.0
      %546 = vmatpush1.msra.mxu0 0.0
      %547 = vmatprep.subr.mxu0 0.0
      %548 = vmatpush1.msra.mxu0 0.0
      %549 = vmatprep.subr.mxu0 0.0
      %550 = vmatpush1.msra.mxu0 0.0
      %551 = vmatprep.subr.mxu0 0.0
      %552 = vmatpush1.msra.mxu0 0.0
      %553 = vmatprep.subr.mxu0 0.0
      %554 = vmatpush1.msra.mxu0 0.0
      %555 = vmatprep.subr.mxu0 0.0
      %556 = vmatpush1.msra.mxu0 0.0
      %557 = vmatprep.subr.mxu0 0.0
      %558 = vmatpush1.msra.mxu0 0.0
      %559 = vmatprep.subr.mxu0 0.0
      %560 = vmatpush1.msra.mxu0 0.0
      %561 = vmatprep.subr.mxu0 0.0
      %562 = vmatpush1.msra.mxu0 0.0
      %563 = vmatprep.subr.mxu0 0.0
      %564 = vmatpush1.msra.mxu0 0.0
      %565 = vmatprep.subr.mxu0 0.0
      %566 = vmatpush1.msra.mxu0 0.0
      %567 = vmatprep.subr.mxu0 0.0
      %568 = vmatpush1.msra.mxu0 0.0
      %569 = vmatprep.subr.mxu0 0.0
      %570 = vmatpush1.msra.mxu0 0.0
      %571 = vmatprep.subr.mxu0 0.0
      %572 = vmatpush1.msra.mxu0 0.0
      %573 = vmatprep.subr.mxu0 0.0
      %574 = vmatpush1.msra.mxu0 0.0
      %575 = vmatprep.subr.mxu0 0.0
      %576 = vmatpush1.msra.mxu0 0.0
      %577 = vmatprep.subr.mxu0 0.0
      %578 = vmatpush1.msra.mxu0 0.0
      %579 = vmatprep.subr.mxu0 0.0
      %580 = vmatpush1.msra.mxu0 0.0
      %581 = vmatprep.subr.mxu0 0.0
      %582 = vmatpush1.msra.mxu0 0.0
      %583 = vmatprep.subr.mxu0 0.0
      %584 = vmatpush1.msra.mxu0 0.0
      %585 = vmatprep.mubr.f32.mxu0 0.0
      %586 = vmatmul.mubr.f32.gmra.mrb[0].mxu0 %v519
      %v587 = vpop.f32.mrb[0].mxu0
      %v588 = vadd.f32 %v515, %v587
      %v589 = vpop.f32.mrb[0].mxu0
      %590 = vdwg.mxu0
      %vm591 = vcmask 74752
      %v592 = vsel %vm591, %v588, -inf
      %593 = vmax.xlane.f32.xlu0 %v592
      %v594 = vpop.xlane.xlu0 %593
      %v595 = vsub.f32 %v588, %v594
      %v596 = vmul.f32 %v595, 1.442695
      %v597 = vpow.pop %v596
      %v598 = vsel %vm591, %v597, 0.0
      %599 = vadd.xlane.f32.xlu0 %v598
      %v600 = vpop.xlane.xlu0 %599
      %v601 = vrcp.pop %v600
      %v602 = vmul.f32 %v597, %v601
      %603 = vst.msk [vmem:[#allocation3] sm:$0x3] %vm591, %v602
    $region29: #{nima_forward.1} parent=1 // pred_fallthru
      _
    // Predicated region
    $region30: #{nima_forward.1} parent=1 // pred_check
      _
    $region31: #{nima_forward.1} parent=1 // pred_check_branch
      %605 = sbr.rel (0) target = $region33
    $region32: #{nima_forward.1} parent=1 // pred_region
      %s607 = ssub.s32 32, 32
      %608 = vsyncadd [#allocation4], %s607
      %s610 = sshll.u32 [#allocation3], 4
      %s611 = int_to_ptr.vmem [resolvable:$true] %s610
      %613 = dma.vmem_to_hbm [thread:$0]  %s611, 32, %s5, [#allocation4]
    $region33: #{nima_forward.1} parent=1 // pred_fallthru
      _
    // Predicated region
    $region34: #{nima_forward.1} parent=1 // pred_check
      _
    $region35: #{nima_forward.1} parent=1 // pred_check_branch
      %615 = sbr.rel (0) target = $region37
    $region36: #{nima_forward.1} parent=1 // pred_region
      %616 = dma.done [#allocation4], 32
    $region37: #{nima_forward.1} parent=1 // pred_fallthru
      _
    %617 = vsyncpa [#allocation4], 1

</llo_original>
